<compile_context>
chip_gen: v6e
topology: v6e:2x2x1
jax: 0.10.0
libtpu: 0.0.40
codegen_flags: <defaults>
</compile_context>

<pallas_src>
from typing import NamedTuple
import math

import jax
import jax.numpy as jnp
from jax.experimental import pallas as pl
from jax.experimental.pallas import tpu as pltpu


def _round_up(x: int, m: int) -> int:
    return (x + m - 1) // m * m


def _physical_vmem_bytes(default: int = 64 << 20) -> int:
    """Per-TensorCore VMEM capacity; conservative 64 MiB (v7x) if unknown."""
    try:
        cap = getattr(pltpu.get_tpu_info(), "vmem_capacity_bytes", None)
        if cap:
            return int(cap)
    except Exception:
        pass
    return default


# ---------------------------------------------------------------------------
# Kernels
# ---------------------------------------------------------------------------
def mlp_kernel_resident(x_ref, w_fc_ref, w_proj_ref, o_ref):
    """Whole hidden dim in one shot; weights are VMEM-resident.

    x_ref:      (tm, C_pad)     original activation dtype
    w_fc_ref:   (C_pad, H_pad)  compute dtype   (zero-padded W_fc^T)
    w_proj_ref: (H_pad, C_pad)  compute dtype   (zero-padded W_proj^T)
    o_ref:      (tm, C_pad)     output dtype
    """
    x = x_ref[...].astype(w_fc_ref.dtype)
    h = jnp.dot(x, w_fc_ref[...], preferred_element_type=jnp.float32)
    h = jnp.square(jnp.maximum(h, 0.0))
    o_ref[...] = jnp.dot(h.astype(w_proj_ref.dtype), w_proj_ref[...],
                         preferred_element_type=jnp.float32).astype(o_ref.dtype)


def mlp_kernel_slabbed(x_ref, w_fc_ref, w_proj_ref, o_ref, acc_ref):
    """One (tm, C_pad) token tile x one th-wide slab of the hidden dimension.

    H is the contraction axis of the second matmul, so slab-wise accumulation
    in the f32 VMEM scratch is exact.
    """
    j = pl.program_id(1)

    @pl.when(j == 0)
    def _init():
        acc_ref[...] = jnp.zeros_like(acc_ref)

    x = x_ref[...].astype(w_fc_ref.dtype)
    h = jnp.dot(x, w_fc_ref[...], preferred_element_type=jnp.float32)
    h = jnp.square(jnp.maximum(h, 0.0))
    acc_ref[...] += jnp.dot(h.astype(w_proj_ref.dtype), w_proj_ref[...],
                            preferred_element_type=jnp.float32)

    @pl.when(j == pl.num_programs(1) - 1)
    def _finalize():
        o_ref[...] = acc_ref[...].astype(o_ref.dtype)


# ---------------------------------------------------------------------------
# Parameter prep + forward
# ---------------------------------------------------------------------------
class MLPParams(NamedTuple):
    w_fc_t: jax.Array        # (C_pad, H_pad) compute dtype; zero-padded W_fc^T
    w_proj_t: jax.Array      # (H_pad, C_pad) compute dtype; zero-padded W_proj^T
    n_embd: int              # original C
    c_pad: int
    h_pad: int
    th: int                  # hidden-slab width; th == h_pad => resident weights
    tm: int                  # token-tile target (multiple of 8)
    compute_dtype: jnp.dtype


def _footprint_bytes(tm, c_pad, th, itemsize, resident,
                     x_itemsize=4, out_itemsize=4):
    """Per-step VMEM footprint (bytes) of the kernel for a given tiling."""
    f = 2 * tm * c_pad * x_itemsize          # x tiles (double-buffered, orig dtype)
    f += tm * c_pad * itemsize               # in-kernel cast copy of the x tile
    f += 2 * tm * c_pad * out_itemsize       # output tiles (double-buffered)
    f += tm * th * (4 + itemsize)            # (tm, th) f32 intermediate + cast copy
    if resident:
        f += 2 * c_pad * th * itemsize       # both weights, single-buffered
    else:
        f += 2 * 2 * c_pad * th * itemsize   # two weight slabs, double-buffered
        f += tm * c_pad * 4                  # f32 accumulator scratch
    return f


def prepare_mlp_params(w_fc, w_proj, *, compute_dtype=jnp.bfloat16, tm=256,
                       hidden_block=None, vmem_budget_bytes=None):
    """One-time parameter prep: transpose to (in, out), cast, zero-pad, size slabs.

    w_fc:   (4C, C)  torch nn.Linear (out_features, in_features) layout
    w_proj: (C, 4C)
    """
    H, C = w_fc.shape
    assert w_proj.shape == (C, H), (w_fc.shape, w_proj.shape)
    assert tm % 8 == 0

    c_pad = _round_up(C, 128)
    h128 = _round_up(H, 128)
    itemsize = jnp.dtype(compute_dtype).itemsize

    if vmem_budget_bytes is None:
        # 85% of physical per-core VMEM: ~108 MiB on v5e/v6e, ~54 MiB on v7x.
        vmem_budget_bytes = int(_physical_vmem_bytes() * 0.85)

    if hidden_block is not None:
        th = int(hidden_block)
        assert th % 128 == 0
        h_pad = _round_up(h128, th)
        if th >= h_pad:
            th = h_pad
    else:
        # Prefer fully VMEM-resident weights (single slab, single-buffered):
        # removes all per-token-tile weight re-streaming from HBM.
        if _footprint_bytes(tm, c_pad, h128, itemsize, True) <= vmem_budget_bytes:
            th, h_pad = h128, h128
        else:
            # Slabbed fallback: largest th that fits, in multiples of 256
            # (2x256^2 MXU on v6e/v7x); 128 only as a last resort (v5e MXU).
            th = _round_up(h128, 256)
            while th > 256 and _footprint_bytes(tm, c_pad, th, itemsize,
                                                False) > vmem_budget_bytes:
                th = max(256, _round_up(th // 2, 256))
            if _footprint_bytes(tm, c_pad, th, itemsize, False) > vmem_budget_bytes:
                th = 128
            h_pad = _round_up(h128, th)

    w_fc_t = jnp.zeros((c_pad, h_pad), compute_dtype)
    w_fc_t = w_fc_t.at[:C, :H].set(jnp.asarray(w_fc).T.astype(compute_dtype))
    w_proj_t = jnp.zeros((h_pad, c_pad), compute_dtype)
    w_proj_t = w_proj_t.at[:H, :C].set(jnp.asarray(w_proj).T.astype(compute_dtype))

    return MLPParams(w_fc_t, w_proj_t, C, c_pad, h_pad, th, tm,
                     jnp.dtype(compute_dtype))


def mlp_forward(x, params: MLPParams):
    """x: (..., C) -> (..., C) in x.dtype.  y = relu(x @ W_fc^T)^2 @ W_proj^T."""
    *lead, C = x.shape
    assert C == params.n_embd
    out_dtype = x.dtype
    c_pad, h_pad, th = params.c_pad, params.h_pad, params.th
    resident = (th == h_pad)

    M = math.prod(lead) if lead else 1
    m8 = _round_up(max(M, 1), 8)
    tm = min(params.tm, m8)
    # Keep the "parallel" token axis >= 2 steps whenever M allows, so v7x's
    # second TensorCore gets work and the x/out DMAs have steps to pipeline.
    if m8 <= tm and m8 >= 16:
        tm = _round_up((m8 + 1) // 2, 8)
    m_pad = _round_up(m8, tm)

    # x stays in its original dtype; the kernel casts per tile (no extra HBM
    # round trip through a padded bf16 activation copy).
    x2d = x.reshape(M, C)
    if m_pad != M or c_pad != C:
        x2d = jnp.pad(x2d, ((0, m_pad - M), (0, c_pad - C)))

    x_itemsize = jnp.dtype(x2d.dtype).itemsize
    out_itemsize = jnp.dtype(out_dtype).itemsize
    itemsize = jnp.dtype(params.compute_dtype).itemsize
    footprint = _footprint_bytes(tm, c_pad, th, itemsize, resident,
                                 x_itemsize=x_itemsize, out_itemsize=out_itemsize)
    phys = _physical_vmem_bytes()
    vmem_limit = max(32 << 20, int(footprint * 1.5) + (4 << 20))
    vmem_limit = min(vmem_limit, int(phys * 0.9))   # never exceed physical VMEM

    cost = pl.CostEstimate(
        flops=4 * m_pad * c_pad * h_pad,             # two matmuls, 2*M*C*H each
        transcendentals=0,
        bytes_accessed=(m_pad * c_pad * (x_itemsize + out_itemsize)
                        + 2 * c_pad * h_pad * itemsize),
    )

    if resident:
        grid = (m_pad // tm,)

        def build_in_specs(weight_pipeline_mode):
            wkw = ({} if weight_pipeline_mode is None
                   else {"pipeline_mode": weight_pipeline_mode})
            return [
                pl.BlockSpec((tm, c_pad), lambda i: (i, 0)),
                # Constant index maps: both weights are DMA'd from HBM exactly
                # once and stay VMEM-resident across all token tiles.
                pl.BlockSpec((c_pad, h_pad), lambda i: (0, 0), **wkw),
                pl.BlockSpec((h_pad, c_pad), lambda i: (0, 0), **wkw),
            ]

        def run(weight_pipeline_mode):
            return pl.pallas_call(
                mlp_kernel_resident,
                out_shape=jax.ShapeDtypeStruct((m_pad, c_pad), out_dtype),
                grid_spec=pltpu.PrefetchScalarGridSpec(
                    num_scalar_prefetch=0,
                    grid=grid,
                    in_specs=build_in_specs(weight_pipeline_mode),
                    out_specs=pl.BlockSpec((tm, c_pad), lambda i: (i, 0)),
                    scratch_shapes=[]),
                compiler_params=pltpu.CompilerParams(
                    dimension_semantics=("parallel",),
                    vmem_limit_bytes=vmem_limit),
                cost_estimate=cost,
            )(x2d, params.w_fc_t, params.w_proj_t)

        try:
            # Single-buffer the resident weights: halves their VMEM footprint.
            out2d = run(pl.Buffered(1))
        except Exception:
            # Conservative fallback: default double-buffering (weights are
            # still fetched from HBM only once thanks to the constant index
            # maps), so this only costs VMEM headroom, never correctness.
            out2d = run(None)
    else:
        # Hidden slabs = reduction axis, placed last; token axis parallel.
        grid = (m_pad // tm, h_pad // th)
        out2d = pl.pallas_call(
            mlp_kernel_slabbed,
            out_shape=jax.ShapeDtypeStruct((m_pad, c_pad), out_dtype),
            grid_spec=pltpu.PrefetchScalarGridSpec(
                num_scalar_prefetch=0,
                grid=grid,
                in_specs=[
                    pl.BlockSpec((tm, c_pad), lambda i, j: (i, 0)),   # x tile
                    pl.BlockSpec((c_pad, th), lambda i, j: (0, j)),   # W_fc^T slab
                    pl.BlockSpec((th, c_pad), lambda i, j: (j, 0)),   # W_proj^T slab
                ],
                out_specs=pl.BlockSpec((tm, c_pad), lambda i, j: (i, 0)),
                scratch_shapes=[pltpu.VMEM((tm, c_pad), jnp.float32)]),
            compiler_params=pltpu.CompilerParams(
                dimension_semantics=("parallel", "arbitrary"),
                vmem_limit_bytes=vmem_limit),
            cost_estimate=cost,
        )(x2d, params.w_fc_t, params.w_proj_t)

    return out2d[:M, :C].reshape(*lead, C)


if __name__ == "__main__":
    key = jax.random.PRNGKey(0)
    kx, kfc, kproj, kx2, kfc2, kproj2 = jax.random.split(key, 6)

    # --- 1) Small config consistent with the module: n_embd=32, batch=2, seq=8.
    #        f32 compute path, fully resident weights; exact-semantics check.
    B, T, C = 2, 8, 32
    H = 4 * C
    x = jax.random.normal(kx, (B, T, C), dtype=jnp.float32)
    # torch nn.Linear stores weight as (out_features, in_features).  The torch
    # __init__ zeroes c_proj.weight; we use a deterministic nonzero init so the
    # output is verifiable (forward semantics do not depend on init values).
    w_fc = jax.random.normal(kfc, (H, C), dtype=jnp.float32) * 0.02
    w_proj = jax.random.normal(kproj, (C, H), dtype=jnp.float32) * 0.02

    params_f32 = prepare_mlp_params(w_fc, w_proj, compute_dtype=jnp.float32)
    y = jax.block_until_ready(mlp_forward(x, params_f32))
    y_ref = jnp.square(jnp.maximum(x @ w_fc.T, 0.0)) @ w_proj.T
    assert y.shape == (B, T, C)
    assert y.dtype == x.dtype
    assert jnp.allclose(y, y_ref, atol=1e-5, rtol=1e-5), "f32 mismatch vs reference"

    # --- 2) Larger config: bf16 weights, resident-weight path, multi-tile
    #        parallel token axis (pipelining / v7x dual-core sharding).
    B2, T2, C2 = 2, 512, 128
    H2 = 4 * C2
    x2 = jax.random.normal(kx2, (B2, T2, C2), dtype=jnp.float32)
    w_fc2 = jax.random.normal(kfc2, (H2, C2), dtype=jnp.float32) * 0.02
    w_proj2 = jax.random.normal(kproj2, (C2, H2), dtype=jnp.float32) * 0.02

    # bf16-rounded reference (same rounding points as the kernel, f32 accumulation).
    xb = x2.reshape(-1, C2).astype(jnp.bfloat16)
    wfb = w_fc2.astype(jnp.bfloat16)
    wpb = w_proj2.astype(jnp.bfloat16)
    h_ref = jnp.square(jnp.maximum(
        jnp.dot(xb, wfb.T, preferred_element_type=jnp.float32), 0.0))
    y2_ref = jnp.dot(h_ref.astype(jnp.bfloat16), wpb.T,
                     preferred_element_type=jnp.float32).reshape(B2, T2, C2)

    params_bf16 = prepare_mlp_params(w_fc2, w_proj2, compute_dtype=jnp.bfloat16,
                                     tm=256)
    y2 = jax.block_until_ready(mlp_forward(x2, params_bf16))
    assert y2.shape == (B2, T2, C2)
    assert jnp.allclose(y2, y2_ref, atol=1e-2, rtol=1e-2), "bf16 resident mismatch"

    # --- 3) Force the slabbed fallback path (hidden axis blocked, f32 VMEM
    #        accumulator) and check it against the same reference.
    params_slab = prepare_mlp_params(w_fc2, w_proj2, compute_dtype=jnp.bfloat16,
                                     tm=256, hidden_block=256)
    assert params_slab.th < params_slab.h_pad   # really exercises the slab path
    y3 = jax.block_until_ready(mlp_forward(x2, params_slab))
    assert jnp.allclose(y3, y2_ref, atol=1e-2, rtol=1e-2), "bf16 slabbed mismatch"

    print("KERNEL_OK")
</pallas_src>

<mosaic_0001>
module attributes {stable_mosaic.version = 11 : i64} {
  func.func @mlp_kernel_resident(%arg0: i32, %arg1: memref<8x128xf32, #tpu.memory_space<vmem>>, %arg2: memref<128x128xf32, #tpu.memory_space<vmem>>, %arg3: memref<128x128xf32, #tpu.memory_space<vmem>>, %arg4: memref<8x128xf32, #tpu.memory_space<vmem>>) attributes {dimension_semantics = [#tpu.dimension_semantics<parallel>], iteration_bounds = array<i64: 2>, scalar_prefetch = 0 : i64, scratch_operands = 0 : i64, tpu.core_type = #tpu.core_type<tc>, window_params = [{transform_indices = @transform_0, window_bounds = array<i64: 8, 128>}, {pipeline_mode = #tpu.pipeline_mode<synchronous>, transform_indices = @transform_1, window_bounds = array<i64: 128, 128>}, {pipeline_mode = #tpu.pipeline_mode<synchronous>, transform_indices = @transform_2, window_bounds = array<i64: 128, 128>}, {transform_indices = @transform_3, window_bounds = array<i64: 8, 128>}]} {
    %c0 = arith.constant 0 : index
    %c0_0 = arith.constant 0 : index
    %0 = vector.load %arg1[%c0, %c0_0] : memref<8x128xf32, #tpu.memory_space<vmem>>, vector<8x128xf32>
    %c0_1 = arith.constant 0 : index
    %c0_2 = arith.constant 0 : index
    %1 = vector.load %arg2[%c0_1, %c0_2] : memref<128x128xf32, #tpu.memory_space<vmem>>, vector<128x128xf32>
    %cst = arith.constant dense<0.000000e+00> : vector<8x128xf32>
    %2 = tpu.matmul %0, %1, %cst {dimension_numbers = #tpu.dot_dimension_numbers<[1], [0], [0], [1], [0, 0, 1, 1], [], []>} : vector<8x128xf32>, vector<128x128xf32>, vector<8x128xf32> -> vector<8x128xf32>
    %cst_3 = arith.constant 0.000000e+00 : f32
    %3 = vector.broadcast %cst_3 : f32 to vector<8x128xf32>
    %4 = arith.maximumf %2, %3 : vector<8x128xf32>
    %5 = arith.mulf %4, %4 : vector<8x128xf32>
    %c0_4 = arith.constant 0 : index
    %c0_5 = arith.constant 0 : index
    %6 = vector.load %arg3[%c0_4, %c0_5] : memref<128x128xf32, #tpu.memory_space<vmem>>, vector<128x128xf32>
    %cst_6 = arith.constant dense<0.000000e+00> : vector<8x128xf32>
    %7 = tpu.matmul %5, %6, %cst_6 {dimension_numbers = #tpu.dot_dimension_numbers<[1], [0], [0], [1], [0, 0, 1, 1], [], []>} : vector<8x128xf32>, vector<128x128xf32>, vector<8x128xf32> -> vector<8x128xf32>
    %c0_7 = arith.constant 0 : index
    %c0_8 = arith.constant 0 : index
    %8 = vector.load %arg4[%c0_7, %c0_8] : memref<8x128xf32, #tpu.memory_space<vmem>>, vector<8x128xf32>
    tpu.vector_store %arg4[%c0_7, %c0_8], %7 {strides = array<i32>} : memref<8x128xf32, #tpu.memory_space<vmem>>, vector<8x128xf32>,
    return
  }
  func.func @transform_0(%arg0: i32) -> (i32, i32) {
    %c0_i32 = arith.constant 0 : i32
    %c0_i32_0 = arith.constant 0 : i32
    return %arg0, %c0_i32 : i32, i32
  }
  func.func @transform_1(%arg0: i32) -> (i32, i32) {
    %c0_i32 = arith.constant 0 : i32
    %c0_i32_0 = arith.constant 0 : i32
    %c0_i32_1 = arith.constant 0 : i32
    return %c0_i32, %c0_i32_0 : i32, i32
  }
  func.func @transform_2(%arg0: i32) -> (i32, i32) {
    %c0_i32 = arith.constant 0 : i32
    %c0_i32_0 = arith.constant 0 : i32
    %c0_i32_1 = arith.constant 0 : i32
    return %c0_i32, %c0_i32_0 : i32, i32
  }
  func.func @transform_3(%arg0: i32) -> (i32, i32) {
    %c0_i32 = arith.constant 0 : i32
    %c0_i32_0 = arith.constant 0 : i32
    return %arg0, %c0_i32 : i32, i32
  }
}

module attributes {stable_mosaic.version = 11 : i64} {
  func.func @mlp_kernel_resident(%arg0: i32, %arg1: memref<8x128xf32, #tpu.memory_space<vmem>>, %arg2: memref<128x128xf32, #tpu.memory_space<vmem>>, %arg3: memref<128x128xf32, #tpu.memory_space<vmem>>, %arg4: memref<8x128xf32, #tpu.memory_space<vmem>>) attributes {dimension_semantics = [#tpu.dimension_semantics<parallel>], iteration_bounds = array<i64: 2>, scalar_prefetch = 0 : i64, scratch_operands = 0 : i64, tpu.core_type = #tpu.core_type<tc>, window_params = [{transform_indices = @transform_0, window_bounds = array<i64: 8, 128>}, {pipeline_mode = #tpu.pipeline_mode<synchronous>, transform_indices = @transform_1, window_bounds = array<i64: 128, 128>}, {pipeline_mode = #tpu.pipeline_mode<synchronous>, transform_indices = @transform_2, window_bounds = array<i64: 128, 128>}, {transform_indices = @transform_3, window_bounds = array<i64: 8, 128>}]} {
    %c0 = arith.constant 0 : index
    %c0_0 = arith.constant 0 : index
    %0 = vector.load %arg1[%c0, %c0_0] : memref<8x128xf32, #tpu.memory_space<vmem>>, vector<8x128xf32>
    %c0_1 = arith.constant 0 : index
    %c0_2 = arith.constant 0 : index
    %1 = vector.load %arg2[%c0_1, %c0_2] : memref<128x128xf32, #tpu.memory_space<vmem>>, vector<128x128xf32>
    %cst = arith.constant dense<0.000000e+00> : vector<8x128xf32>
    %2 = tpu.matmul %0, %1, %cst {dimension_numbers = #tpu.dot_dimension_numbers<[1], [0], [0], [1], [0, 0, 1, 1], [], []>} : vector<8x128xf32>, vector<128x128xf32>, vector<8x128xf32> -> vector<8x128xf32>
    %cst_3 = arith.constant 0.000000e+00 : f32
    %3 = vector.broadcast %cst_3 : f32 to vector<8x128xf32>
    %4 = arith.maximumf %2, %3 : vector<8x128xf32>
    %5 = arith.mulf %4, %4 : vector<8x128xf32>
    %c0_4 = arith.constant 0 : index
    %c0_5 = arith.constant 0 : index
    %6 = vector.load %arg3[%c0_4, %c0_5] : memref<128x128xf32, #tpu.memory_space<vmem>>, vector<128x128xf32>
    %cst_6 = arith.constant dense<0.000000e+00> : vector<8x128xf32>
    %7 = tpu.matmul %5, %6, %cst_6 {dimension_numbers = #tpu.dot_dimension_numbers<[1], [0], [0], [1], [0, 0, 1, 1], [], []>} : vector<8x128xf32>, vector<128x128xf32>, vector<8x128xf32> -> vector<8x128xf32>
    %c0_7 = arith.constant 0 : index
    %c0_8 = arith.constant 0 : index
    %8 = vector.load %arg4[%c0_7, %c0_8] : memref<8x128xf32, #tpu.memory_space<vmem>>, vector<8x128xf32>
    tpu.vector_store %arg4[%c0_7, %c0_8], %7 {strides = array<i32>} : memref<8x128xf32, #tpu.memory_space<vmem>>, vector<8x128xf32>,
    return
  }
  func.func @transform_0(%arg0: i32) -> (i32, i32) {
    %c0_i32 = arith.constant 0 : i32
    %c0_i32_0 = arith.constant 0 : i32
    return %arg0, %c0_i32 : i32, i32
  }
  func.func @transform_1(%arg0: i32) -> (i32, i32) {
    %c0_i32 = arith.constant 0 : i32
    %c0_i32_0 = arith.constant 0 : i32
    %c0_i32_1 = arith.constant 0 : i32
    return %c0_i32, %c0_i32_0 : i32, i32
  }
  func.func @transform_2(%arg0: i32) -> (i32, i32) {
    %c0_i32 = arith.constant 0 : i32
    %c0_i32_0 = arith.constant 0 : i32
    %c0_i32_1 = arith.constant 0 : i32
    return %c0_i32, %c0_i32_0 : i32, i32
  }
  func.func @transform_3(%arg0: i32) -> (i32, i32) {
    %c0_i32 = arith.constant 0 : i32
    %c0_i32_0 = arith.constant 0 : i32
    return %arg0, %c0_i32 : i32, i32
  }
}

</mosaic_0001>

<llo_original>
// kernel: tpu_custom_call.1
$region0: #{tpu_custom_call.1}
  #allocation0 [shape = 'u32[]', space=smem, size = 0x4, offset = 0x4, fixed_abs, tag = 'smem constant byte address 0x4 - core index']
  #allocation1 [shape = 'u32[144,128]{1,0:T(1,128)}', space=vmem, size = 0x12000, scoped, tag = 'internal scratch']
  %s0 = inlined_call_operand.hbm [shape: f32[16,128], index: 0, kind: input, shape index: {}]
  %s1 = inlined_call_operand.hbm [shape: f32[128,128], index: 1, kind: input, shape index: {}]
  %s2 = inlined_call_operand.hbm [shape: f32[128,128], index: 2, kind: input, shape index: {}]
  %s3 = inlined_call_operand.hbm [shape: f32[16,128], index: 3, kind: output, shape index: {}]
  %s4 = sld [smem:[#allocation0]]
  $region57: #{tpu_custom_call.1} parent=0
    _
  %s6 = ssub.s32 1, %s4
  %s7 = scalar_select 0, %s6, %s4
  $region1: #{tpu_custom_call.1} parent=0
    #allocation2 [shape = 'u8[8192]{0}', space=vmem, size = 0x2000, scoped, tag = 'input window, operand 0']
    #allocation3 [shape = 's32[2]{0}', space=sflag, size = 0x8, scoped, tag = 'scoped memory for tpu_custom_call.1']
    #allocation4 [shape = 's32[2]{0}', space=sflag, size = 0x8, scoped, tag = 'scoped memory for tpu_custom_call.1']
    #allocation5 [shape = 'u8[65536]{0}', space=vmem, size = 0x10000, scoped, tag = 'input window, operand 1, single buffered']
    #allocation6 [shape = 's32[1]{0}', space=sflag, size = 0x4, scoped, tag = 'scoped memory for tpu_custom_call.1']
    #allocation7 [shape = 'u8[65536]{0}', space=vmem, size = 0x10000, scoped, tag = 'input window, operand 2, single buffered']
    #allocation8 [shape = 'u8[8192]{0}', space=vmem, size = 0x2000, scoped, tag = 'output window, operand 0']
    %8 = vsyncpa [#allocation3], 0
    %s9 = scalar_lea.sflag [#allocation3], 1
    %10 = vsyncpa %s9, 0
    %11 = vsyncpa [#allocation6], 0
    %12 = vsyncpa [#allocation4], 0
    %s13 = scalar_lea.sflag [#allocation4], 1
    %14 = vsyncpa %s13, 0
    loop: start=0, step=1, limit=4
    $region2: #{tpu_custom_call.1} parent=1 // loop_pre_header
      _
    $region3: #{tpu_custom_call.1} parent=1 // loop_header
      %s16 = sphi 0, %s20
      %p17 = scmp.ge.s32.totalorder %s16, 4
      %s26 = sphi 0, %s28
      %s29 = sphi 0, %s26
      %s30 = sphi 0, %s29
      %s46 = sphi 0, %s30
      %s50 = sphi 0, %s50
      %s52 = sphi 0, %s50
      %s53 = sphi 0, %s52
      %s67 = sphi 0, %s53
      %s71 = sphi 0, %s71
      %s73 = sphi 0, %s71
      %s74 = sphi 0, %s73
      %s88 = sphi 0, %s74
      %s94 = sphi 0, %s96
      %s97 = sphi 0, %s94
      %s98 = sphi 0, %s97
      %s114 = sphi 0, %s98
    $region4: #{tpu_custom_call.1} parent=1 // loop_header_branch
      %19 = sbr.rel (%p17) target = $region8
    $region5: #{tpu_custom_call.1} parent=1 // loop_body
      %s21 = ssub.s32 %s16, 1
      %s22 = ssub.s32 %s16, 2
      %s23 = sadd.s32 %s16, 1
      %s24 = ssub.s32 %s16, %s23
      %p25 = scmp.eq.s32.totalorder %s24, 0
      %s27 = sadd.s32 %s26, 1
      %s28 = scalar_select %p25, %s26, %s27
      %p31 = pneg %p25
      %p32 = scmp.eq.s32.totalorder %s16, 1
      %p33 = por %p31, %p32
      %p34 = scmp.ne.s32.totalorder %s26, %s29
      %p35 = scmp.eq.s32.totalorder %s16, 0
      %p36 = por %p34, %p35
      %p37 = scmp.ne.s32.totalorder %s26, %s29
      %p38 = scmp.eq.s32.totalorder %s21, 1
      %p39 = por %p37, %p38
      %p40 = scmp.ne.s32.totalorder %s29, %s30
      %p41 = scmp.eq.s32.totalorder %s21, 0
      %p42 = por %p40, %p41
      %p43 = scmp.ne.s32.totalorder %s29, %s30
      %p44 = scmp.eq.s32.totalorder %s22, 1
      %p45 = por %p43, %p44
      %p47 = scmp.ne.s32.totalorder %s30, %s46
      %p48 = scmp.eq.s32.totalorder %s22, 0
      %p49 = por %p47, %p48
      %s51 = sadd.s32 %s50, 1
      %p54 = scmp.eq.s32.totalorder %s16, 1
      %p55 = scmp.ne.s32.totalorder %s50, %s52
      %p56 = scmp.eq.s32.totalorder %s16, 0
      %p57 = por %p55, %p56
      %p58 = scmp.ne.s32.totalorder %s50, %s52
      %p59 = scmp.eq.s32.totalorder %s21, 1
      %p60 = por %p58, %p59
      %p61 = scmp.ne.s32.totalorder %s52, %s53
      %p62 = scmp.eq.s32.totalorder %s21, 0
      %p63 = por %p61, %p62
      %p64 = scmp.ne.s32.totalorder %s52, %s53
      %p65 = scmp.eq.s32.totalorder %s22, 1
      %p66 = por %p64, %p65
      %p68 = scmp.ne.s32.totalorder %s53, %s67
      %p69 = scmp.eq.s32.totalorder %s22, 0
      %p70 = por %p68, %p69
      %s72 = sadd.s32 %s71, 1
      %p75 = scmp.eq.s32.totalorder %s16, 1
      %p76 = scmp.ne.s32.totalorder %s71, %s73
      %p77 = scmp.eq.s32.totalorder %s16, 0
      %p78 = por %p76, %p77
      %p79 = scmp.ne.s32.totalorder %s71, %s73
      %p80 = scmp.eq.s32.totalorder %s21, 1
      %p81 = por %p79, %p80
      %p82 = scmp.ne.s32.totalorder %s73, %s74
      %p83 = scmp.eq.s32.totalorder %s21, 0
      %p84 = por %p82, %p83
      %p85 = scmp.ne.s32.totalorder %s73, %s74
      %p86 = scmp.eq.s32.totalorder %s22, 1
      %p87 = por %p85, %p86
      %p89 = scmp.ne.s32.totalorder %s74, %s88
      %p90 = scmp.eq.s32.totalorder %s22, 0
      %p91 = por %p89, %p90
      %s92 = ssub.s32 %s16, %s23
      %p93 = scmp.eq.s32.totalorder %s92, 0
      %s95 = sadd.s32 %s94, 1
      %s96 = scalar_select %p93, %s94, %s95
      %p99 = pneg %p93
      %p100 = scmp.eq.s32.totalorder %s16, 1
      %p101 = por %p99, %p100
      %p102 = scmp.ne.s32.totalorder %s94, %s97
      %p103 = scmp.eq.s32.totalorder %s16, 0
      %p104 = por %p102, %p103
      %p105 = scmp.ne.s32.totalorder %s94, %s97
      %p106 = scmp.eq.s32.totalorder %s21, 1
      %p107 = por %p105, %p106
      %p108 = scmp.ne.s32.totalorder %s97, %s98
      %p109 = scmp.eq.s32.totalorder %s21, 0
      %p110 = por %p108, %p109
      %p111 = scmp.ne.s32.totalorder %s97, %s98
      %p112 = scmp.eq.s32.totalorder %s22, 1
      %p113 = por %p111, %p112
      %p115 = scmp.ne.s32.totalorder %s98, %s114
      %p116 = scmp.eq.s32.totalorder %s22, 0
      %p117 = por %p115, %p116
      %p118 = scmp.le.s32.totalorder 1, %s16
      %p119 = scmp.lt.s32.totalorder %s16, 3
      %p120 = pnand %p118, %p119
      %p121 = pneg %p120
      // Predicated region
      $region9: #{tpu_custom_call.1} parent=5 // pred_check
        _
      $region10: #{tpu_custom_call.1} parent=5 // pred_check_branch
        %123 = sbr.rel (%p120) target = $region12
      $region11: #{tpu_custom_call.1} parent=5 // pred_region
        %s124 = ssub.s32 %s16, 1
        // Predicated region
        $region13: #{tpu_custom_call.1} parent=11 // pred_check
          %p125 = pneg %p63
        $region14: #{tpu_custom_call.1} parent=11 // pred_check_branch
          %127 = sbr.rel (%p125) target = $region16
        $region15: #{tpu_custom_call.1} parent=11 // pred_region
          %s129 = ssub.s32 2048, 2048
          %130 = vsyncadd [#allocation6], %s129
          %s131 = sshll.u32 [#allocation5], 4
          %s132 = int_to_ptr.vmem [resolvable:$true] %s131
          %137 = dma.hbm_to_vmem [thread:$0]  %s1, 2048, %s132, [#allocation6], 128, 128, 8
        $region16: #{tpu_custom_call.1} parent=11 // pred_fallthru
          _
        // Predicated region
        $region17: #{tpu_custom_call.1} parent=11 // pred_check
          %p138 = pneg %p84
        $region18: #{tpu_custom_call.1} parent=11 // pred_check_branch
          %140 = sbr.rel (%p138) target = $region20
        $region19: #{tpu_custom_call.1} parent=11 // pred_region
          %s142 = ssub.s32 2048, 2048
          %143 = vsyncadd [#allocation6], %s142
          %s144 = sshll.u32 [#allocation7], 4
          %s145 = int_to_ptr.vmem [resolvable:$true] %s144
          %150 = dma.hbm_to_vmem [thread:$0]  %s2, 2048, %s145, [#allocation6], 128, 128, 8
        $region20: #{tpu_custom_call.1} parent=11 // pred_fallthru
          _
      $region12: #{tpu_custom_call.1} parent=5 // pred_fallthru
        _
      %p151 = scmp.lt.s32.totalorder %s16, 2
      // Predicated region
      $region21: #{tpu_custom_call.1} parent=5 // pred_check
        %p152 = pneg %p151
      $region22: #{tpu_custom_call.1} parent=5 // pred_check_branch
        %154 = sbr.rel (%p152) target = $region24
      $region23: #{tpu_custom_call.1} parent=5 // pred_region
        // Predicated region
        $region25: #{tpu_custom_call.1} parent=23 // pred_check
          %p155 = pneg %p36
        $region26: #{tpu_custom_call.1} parent=23 // pred_check_branch
          %157 = sbr.rel (%p155) target = $region28
        $region27: #{tpu_custom_call.1} parent=23 // pred_region
          %s158 = sand.u32 %s26, 1
          %s159 = scalar_lea.sflag [#allocation3], %s158
          %s160 = sand.u32 %s26, 1
          %s161 = smul.addr %s160, 8
          %s162 = scalar_lea.vmem [#allocation2], %s161
          %s164 = ssub.s32 128, 128
          %165 = vsyncadd %s159, %s164
          %s166 = smul.addr %s16, 128
          %s167 = scalar_lea.hbm %s0, %s166
          %s169 = sshll.u32 %s162, 4
          %s170 = int_to_ptr.vmem [resolvable:$true] %s169
          %172 = dma.hbm_to_vmem [thread:$0]  %s167, 128, %s170, %s159
        $region28: #{tpu_custom_call.1} parent=23 // pred_fallthru
          _
      $region24: #{tpu_custom_call.1} parent=5 // pred_fallthru
        _
      %p173 = scmp.le.s32.totalorder 1, %s16
      %p174 = scmp.lt.s32.totalorder %s16, 3
      %p175 = pnand %p173, %p174
      %p176 = pneg %p175
      // Predicated region
      $region29: #{tpu_custom_call.1} parent=5 // pred_check
        _
      $region30: #{tpu_custom_call.1} parent=5 // pred_check_branch
        %178 = sbr.rel (%p175) target = $region32
      $region31: #{tpu_custom_call.1} parent=5 // pred_region
        %s179 = ssub.s32 %s16, 1
        %s180 = sand.u32 %s29, 1
        %s181 = scalar_lea.sflag [#allocation3], %s180
        %s182 = sand.u32 %s29, 1
        %s183 = smul.addr %s182, 8
        %s184 = scalar_lea.vmem [#allocation2], %s183
        // Predicated region
        $region33: #{tpu_custom_call.1} parent=31 // pred_check
          %p185 = pneg %p42
        $region34: #{tpu_custom_call.1} parent=31 // pred_check_branch
          %187 = sbr.rel (%p185) target = $region36
        $region35: #{tpu_custom_call.1} parent=31 // pred_region
          %188 = dma.done %s181, 128
        $region36: #{tpu_custom_call.1} parent=31 // pred_fallthru
          _
        // Predicated region
        $region37: #{tpu_custom_call.1} parent=31 // pred_check
          %p189 = pneg %p63
        $region38: #{tpu_custom_call.1} parent=31 // pred_check_branch
          %191 = sbr.rel (%p189) target = $region40
        $region39: #{tpu_custom_call.1} parent=31 // pred_region
          %192 = dma.done [#allocation6], 2048
        $region40: #{tpu_custom_call.1} parent=31 // pred_fallthru
          _
        // Predicated region
        $region41: #{tpu_custom_call.1} parent=31 // pred_check
          %p193 = pneg %p84
        $region42: #{tpu_custom_call.1} parent=31 // pred_check_branch
          %195 = sbr.rel (%p193) target = $region44
        $region43: #{tpu_custom_call.1} parent=31 // pred_region
          %196 = dma.done [#allocation6], 2048
        $region44: #{tpu_custom_call.1} parent=31 // pred_fallthru
          _
        %s197 = sand.u32 %s29, 1
        %s198 = scalar_lea.sflag [#allocation3], %s197
        %s199 = sand.u32 %s29, 1
        %s200 = smul.addr %s199, 8
        %s201 = scalar_lea.vmem [#allocation2], %s200
        %p202 = pneg %p42
        %p203 = pneg %p39
        %p204 = pneg %p63
        %p205 = pneg %p60
        %p206 = pneg %p84
        %p207 = pneg %p81
        %p208 = pneg %p110
        %p209 = pneg %p107
        %s210 = sand.u32 %s97, 1
        %s211 = scalar_lea.sflag [#allocation4], %s210
        %s212 = sand.u32 %s97, 1
        %s213 = smul.addr %s212, 8
        %s214 = scalar_lea.vmem [#allocation8], %s213
        %v215 = vld [vmem:[%s184] sm:$0xff]
        %v216 = vld [vmem:[#allocation5] sm:$0xff]
        %v217 = vld [vmem:[#allocation5 + $0x8] sm:$0xff]
        %v218 = vld [vmem:[#allocation5 + $0x10] sm:$0xff]
        %v219 = vld [vmem:[#allocation5 + $0x18] sm:$0xff]
        %v220 = vld [vmem:[#allocation5 + $0x20] sm:$0xff]
        %v221 = vld [vmem:[#allocation5 + $0x28] sm:$0xff]
        %v222 = vld [vmem:[#allocation5 + $0x30] sm:$0xff]
        %v223 = vld [vmem:[#allocation5 + $0x38] sm:$0xff]
        %v224 = vld [vmem:[#allocation5 + $0x40] sm:$0xff]
        %v225 = vld [vmem:[#allocation5 + $0x48] sm:$0xff]
        %v226 = vld [vmem:[#allocation5 + $0x50] sm:$0xff]
        %v227 = vld [vmem:[#allocation5 + $0x58] sm:$0xff]
        %v228 = vld [vmem:[#allocation5 + $0x60] sm:$0xff]
        %v229 = vld [vmem:[#allocation5 + $0x68] sm:$0xff]
        %v230 = vld [vmem:[#allocation5 + $0x70] sm:$0xff]
        %v231 = vld [vmem:[#allocation5 + $0x78] sm:$0xff]
        %232 = vmatprep.subr.mxu0 0.0
        %233 = vmatpush1.msra.mxu0 %v231
        %234 = vmatprep.subr.mxu0 0.0
        %235 = vmatpush1.msra.mxu0 %v230
        %236 = vmatprep.subr.mxu0 0.0
        %237 = vmatpush1.msra.mxu0 %v229
        %238 = vmatprep.subr.mxu0 0.0
        %239 = vmatpush1.msra.mxu0 %v228
        %240 = vmatprep.subr.mxu0 0.0
        %241 = vmatpush1.msra.mxu0 %v227
        %242 = vmatprep.subr.mxu0 0.0
        %243 = vmatpush1.msra.mxu0 %v226
        %244 = vmatprep.subr.mxu0 0.0
        %245 = vmatpush1.msra.mxu0 %v225
        %246 = vmatprep.subr.mxu0 0.0
        %247 = vmatpush1.msra.mxu0 %v224
        %248 = vmatprep.subr.mxu0 0.0
        %249 = vmatpush1.msra.mxu0 %v223
        %250 = vmatprep.subr.mxu0 0.0
        %251 = vmatpush1.msra.mxu0 %v222
        %252 = vmatprep.subr.mxu0 0.0
        %253 = vmatpush1.msra.mxu0 %v221
        %254 = vmatprep.subr.mxu0 0.0
        %255 = vmatpush1.msra.mxu0 %v220
        %256 = vmatprep.subr.mxu0 0.0
        %257 = vmatpush1.msra.mxu0 %v219
        %258 = vmatprep.subr.mxu0 0.0
        %259 = vmatpush1.msra.mxu0 %v218
        %260 = vmatprep.subr.mxu0 0.0
        %261 = vmatpush1.msra.mxu0 %v217
        %262 = vmatprep.subr.mxu0 0.0
        %263 = vmatpush1.msra.mxu0 %v216
        %264 = vmatprep.subr.mxu0 0.0
        %265 = vmatpush2.msra.mxu0 0.0
        %266 = vmatprep.subr.mxu0 0.0
        %267 = vmatpush2.msra.mxu0 0.0
        %268 = vmatprep.subr.mxu0 0.0
        %269 = vmatpush2.msra.mxu0 0.0
        %270 = vmatprep.subr.mxu0 0.0
        %271 = vmatpush2.msra.mxu0 0.0
        %272 = vmatprep.subr.mxu0 0.0
        %273 = vmatpush2.msra.mxu0 0.0
        %274 = vmatprep.subr.mxu0 0.0
        %275 = vmatpush2.msra.mxu0 0.0
        %276 = vmatprep.subr.mxu0 0.0
        %277 = vmatpush2.msra.mxu0 0.0
        %278 = vmatprep.subr.mxu0 0.0
        %279 = vmatpush2.msra.mxu0 0.0
        %280 = vmatprep.subr.mxu0 0.0
        %281 = vmatpush2.msra.mxu0 0.0
        %282 = vmatprep.subr.mxu0 0.0
        %283 = vmatpush2.msra.mxu0 0.0
        %284 = vmatprep.subr.mxu0 0.0
        %285 = vmatpush2.msra.mxu0 0.0
        %286 = vmatprep.subr.mxu0 0.0
        %287 = vmatpush2.msra.mxu0 0.0
        %288 = vmatprep.subr.mxu0 0.0
        %289 = vmatpush2.msra.mxu0 0.0
        %290 = vmatprep.subr.mxu0 0.0
        %291 = vmatpush2.msra.mxu0 0.0
        %292 = vmatprep.subr.mxu0 0.0
        %293 = vmatpush2.msra.mxu0 0.0
        %294 = vmatprep.subr.mxu0 0.0
        %295 = vmatpush2.msra.mxu0 0.0
        %296 = vmatprep.mubr.f32.mxu0 0.0
        %297 = vmatmul.mubr.f32.gmra.mxu0 %v215
        %v298 = vpop.f32.mrf.mxu0
        %v299 = vadd.f32 0.0, %v298
        %v300 = vpop.f32.mrf.mxu0
        %301 = vdwg.mxu0
        %v302 = vmax.f32 %v299, 0.0
        %v303 = vmul.f32 %v302, %v302
        %v304 = vld [vmem:[#allocation7] sm:$0xff]
        %v305 = vld [vmem:[#allocation7 + $0x8] sm:$0xff]
        %v306 = vld [vmem:[#allocation7 + $0x10] sm:$0xff]
        %v307 = vld [vmem:[#allocation7 + $0x18] sm:$0xff]
        %v308 = vld [vmem:[#allocation7 + $0x20] sm:$0xff]
        %v309 = vld [vmem:[#allocation7 + $0x28] sm:$0xff]
        %v310 = vld [vmem:[#allocation7 + $0x30] sm:$0xff]
        %v311 = vld [vmem:[#allocation7 + $0x38] sm:$0xff]
        %v312 = vld [vmem:[#allocation7 + $0x40] sm:$0xff]
        %v313 = vld [vmem:[#allocation7 + $0x48] sm:$0xff]
        %v314 = vld [vmem:[#allocation7 + $0x50] sm:$0xff]
        %v315 = vld [vmem:[#allocation7 + $0x58] sm:$0xff]
        %v316 = vld [vmem:[#allocation7 + $0x60] sm:$0xff]
        %v317 = vld [vmem:[#allocation7 + $0x68] sm:$0xff]
        %v318 = vld [vmem:[#allocation7 + $0x70] sm:$0xff]
        %v319 = vld [vmem:[#allocation7 + $0x78] sm:$0xff]
        %320 = vmatprep.subr.mxu0 0.0
        %321 = vmatpush1.msra.mxu0 %v319
        %322 = vmatprep.subr.mxu0 0.0
        %323 = vmatpush1.msra.mxu0 %v318
        %324 = vmatprep.subr.mxu0 0.0
        %325 = vmatpush1.msra.mxu0 %v317
        %326 = vmatprep.subr.mxu0 0.0
        %327 = vmatpush1.msra.mxu0 %v316
        %328 = vmatprep.subr.mxu0 0.0
        %329 = vmatpush1.msra.mxu0 %v315
        %330 = vmatprep.subr.mxu0 0.0
        %331 = vmatpush1.msra.mxu0 %v314
        %332 = vmatprep.subr.mxu0 0.0
        %333 = vmatpush1.msra.mxu0 %v313
        %334 = vmatprep.subr.mxu0 0.0
        %335 = vmatpush1.msra.mxu0 %v312
        %336 = vmatprep.subr.mxu0 0.0
        %337 = vmatpush1.msra.mxu0 %v311
        %338 = vmatprep.subr.mxu0 0.0
        %339 = vmatpush1.msra.mxu0 %v310
        %340 = vmatprep.subr.mxu0 0.0
        %341 = vmatpush1.msra.mxu0 %v309
        %342 = vmatprep.subr.mxu0 0.0
        %343 = vmatpush1.msra.mxu0 %v308
        %344 = vmatprep.subr.mxu0 0.0
        %345 = vmatpush1.msra.mxu0 %v307
        %346 = vmatprep.subr.mxu0 0.0
        %347 = vmatpush1.msra.mxu0 %v306
        %348 = vmatprep.subr.mxu0 0.0
        %349 = vmatpush1.msra.mxu0 %v305
        %350 = vmatprep.subr.mxu0 0.0
        %351 = vmatpush1.msra.mxu0 %v304
        %352 = vmatprep.subr.mxu0 0.0
        %353 = vmatpush2.msra.mxu0 0.0
        %354 = vmatprep.subr.mxu0 0.0
        %355 = vmatpush2.msra.mxu0 0.0
        %356 = vmatprep.subr.mxu0 0.0
        %357 = vmatpush2.msra.mxu0 0.0
        %358 = vmatprep.subr.mxu0 0.0
        %359 = vmatpush2.msra.mxu0 0.0
        %360 = vmatprep.subr.mxu0 0.0
        %361 = vmatpush2.msra.mxu0 0.0
        %362 = vmatprep.subr.mxu0 0.0
        %363 = vmatpush2.msra.mxu0 0.0
        %364 = vmatprep.subr.mxu0 0.0
        %365 = vmatpush2.msra.mxu0 0.0
        %366 = vmatprep.subr.mxu0 0.0
        %367 = vmatpush2.msra.mxu0 0.0
        %368 = vmatprep.subr.mxu0 0.0
        %369 = vmatpush2.msra.mxu0 0.0
        %370 = vmatprep.subr.mxu0 0.0
        %371 = vmatpush2.msra.mxu0 0.0
        %372 = vmatprep.subr.mxu0 0.0
        %373 = vmatpush2.msra.mxu0 0.0
        %374 = vmatprep.subr.mxu0 0.0
        %375 = vmatpush2.msra.mxu0 0.0
        %376 = vmatprep.subr.mxu0 0.0
        %377 = vmatpush2.msra.mxu0 0.0
        %378 = vmatprep.subr.mxu0 0.0
        %379 = vmatpush2.msra.mxu0 0.0
        %380 = vmatprep.subr.mxu0 0.0
        %381 = vmatpush2.msra.mxu0 0.0
        %382 = vmatprep.subr.mxu0 0.0
        %383 = vmatpush2.msra.mxu0 0.0
        %384 = vmatprep.mubr.f32.mxu0 0.0
        %385 = vmatmul.mubr.f32.gmra.mxu0 %v303
        %v386 = vpop.f32.mrf.mxu0
        %v387 = vadd.f32 0.0, %v386
        %v388 = vpop.f32.mrf.mxu0
        %389 = vdwg.mxu0
        %390 = vst [vmem:[%s214] sm:$0xff] %v387
        %s391 = sand.u32 %s97, 1
        %s392 = scalar_lea.sflag [#allocation4], %s391
        %s393 = sand.u32 %s97, 1
        %s394 = smul.addr %s393, 8
        %s395 = scalar_lea.vmem [#allocation8], %s394
        // Predicated region
        $region45: #{tpu_custom_call.1} parent=31 // pred_check
          %p396 = pneg %p107
        $region46: #{tpu_custom_call.1} parent=31 // pred_check_branch
          %398 = sbr.rel (%p396) target = $region48
        $region47: #{tpu_custom_call.1} parent=31 // pred_region
          %s400 = ssub.s32 128, 128
          %401 = vsyncadd %s392, %s400
          %s402 = smul.addr %s21, 128
          %s403 = scalar_lea.hbm %s3, %s402
          %s405 = sshll.u32 %s395, 4
          %s406 = int_to_ptr.vmem [resolvable:$true] %s405
          %408 = dma.vmem_to_hbm [thread:$0]  %s406, 128, %s403, %s392
        $region48: #{tpu_custom_call.1} parent=31 // pred_fallthru
          _
      $region32: #{tpu_custom_call.1} parent=5 // pred_fallthru
        _
      %p409 = scmp.le.s32.totalorder 2, %s16
      // Predicated region
      $region49: #{tpu_custom_call.1} parent=5 // pred_check
        %p410 = pneg %p409
      $region50: #{tpu_custom_call.1} parent=5 // pred_check_branch
        %412 = sbr.rel (%p410) target = $region52
      $region51: #{tpu_custom_call.1} parent=5 // pred_region
        %s413 = ssub.s32 %s16, 2
        // Predicated region
        $region53: #{tpu_custom_call.1} parent=51 // pred_check
          %p414 = pneg %p113
        $region54: #{tpu_custom_call.1} parent=51 // pred_check_branch
          %416 = sbr.rel (%p414) target = $region56
        $region55: #{tpu_custom_call.1} parent=51 // pred_region
          %s417 = sand.u32 %s98, 1
          %s418 = scalar_lea.sflag [#allocation4], %s417
          %s419 = sand.u32 %s98, 1
          %s420 = smul.addr %s419, 8
          %s421 = scalar_lea.vmem [#allocation8], %s420
          %422 = dma.done %s418, 128
        $region56: #{tpu_custom_call.1} parent=51 // pred_fallthru
          _
      $region52: #{tpu_custom_call.1} parent=5 // pred_fallthru
        _
    $region6: #{tpu_custom_call.1} parent=1 // loop_footer
      %s20 = sadd.s32 1, %s16
    $region7: #{tpu_custom_call.1} parent=1 // loop_footer_branch
      %15 = sbr.rel target = $region3
    $region8: #{tpu_custom_call.1} parent=1 // loop_exit
      _
    %423 = vsyncpa [#allocation3], 1
    %s424 = scalar_lea.sflag [#allocation3], 1
    %425 = vsyncpa %s424, 1
    %426 = vsyncpa [#allocation6], 1
    %427 = vsyncpa [#allocation4], 1
    %s428 = scalar_lea.sflag [#allocation4], 1
    %429 = vsyncpa %s428, 1

// kernel: tpu_custom_call.1
$region0: #{tpu_custom_call.1}
  #allocation0 [shape = 'u32[]', space=smem, size = 0x4, offset = 0x4, fixed_abs, tag = 'smem constant byte address 0x4 - core index']
  #allocation1 [shape = 'u32[144,128]{1,0:T(1,128)}', space=vmem, size = 0x12000, scoped, tag = 'internal scratch']
  %s0 = inlined_call_operand.hbm [shape: f32[16,128], index: 0, kind: input, shape index: {}]
  %s1 = inlined_call_operand.hbm [shape: f32[128,128], index: 1, kind: input, shape index: {}]
  %s2 = inlined_call_operand.hbm [shape: f32[128,128], index: 2, kind: input, shape index: {}]
  %s3 = inlined_call_operand.hbm [shape: f32[16,128], index: 3, kind: output, shape index: {}]
  %s4 = sld [smem:[#allocation0]]
  $region57: #{tpu_custom_call.1} parent=0
    _
  %s6 = ssub.s32 1, %s4
  %s7 = scalar_select 0, %s6, %s4
  $region1: #{tpu_custom_call.1} parent=0
    #allocation2 [shape = 'u8[8192]{0}', space=vmem, size = 0x2000, scoped, tag = 'input window, operand 0']
    #allocation3 [shape = 's32[2]{0}', space=sflag, size = 0x8, scoped, tag = 'scoped memory for tpu_custom_call.1']
    #allocation4 [shape = 's32[2]{0}', space=sflag, size = 0x8, scoped, tag = 'scoped memory for tpu_custom_call.1']
    #allocation5 [shape = 'u8[65536]{0}', space=vmem, size = 0x10000, scoped, tag = 'input window, operand 1, single buffered']
    #allocation6 [shape = 's32[1]{0}', space=sflag, size = 0x4, scoped, tag = 'scoped memory for tpu_custom_call.1']
    #allocation7 [shape = 'u8[65536]{0}', space=vmem, size = 0x10000, scoped, tag = 'input window, operand 2, single buffered']
    #allocation8 [shape = 'u8[8192]{0}', space=vmem, size = 0x2000, scoped, tag = 'output window, operand 0']
    %8 = vsyncpa [#allocation3], 0
    %s9 = scalar_lea.sflag [#allocation3], 1
    %10 = vsyncpa %s9, 0
    %11 = vsyncpa [#allocation6], 0
    %12 = vsyncpa [#allocation4], 0
    %s13 = scalar_lea.sflag [#allocation4], 1
    %14 = vsyncpa %s13, 0
    loop: start=0, step=1, limit=4
    $region2: #{tpu_custom_call.1} parent=1 // loop_pre_header
      _
    $region3: #{tpu_custom_call.1} parent=1 // loop_header
      %s16 = sphi 0, %s20
      %p17 = scmp.ge.s32.totalorder %s16, 4
      %s26 = sphi 0, %s28
      %s29 = sphi 0, %s26
      %s30 = sphi 0, %s29
      %s46 = sphi 0, %s30
      %s50 = sphi 0, %s50
      %s52 = sphi 0, %s50
      %s53 = sphi 0, %s52
      %s67 = sphi 0, %s53
      %s71 = sphi 0, %s71
      %s73 = sphi 0, %s71
      %s74 = sphi 0, %s73
      %s88 = sphi 0, %s74
      %s94 = sphi 0, %s96
      %s97 = sphi 0, %s94
      %s98 = sphi 0, %s97
      %s114 = sphi 0, %s98
    $region4: #{tpu_custom_call.1} parent=1 // loop_header_branch
      %19 = sbr.rel (%p17) target = $region8
    $region5: #{tpu_custom_call.1} parent=1 // loop_body
      %s21 = ssub.s32 %s16, 1
      %s22 = ssub.s32 %s16, 2
      %s23 = sadd.s32 %s16, 1
      %s24 = ssub.s32 %s16, %s23
      %p25 = scmp.eq.s32.totalorder %s24, 0
      %s27 = sadd.s32 %s26, 1
      %s28 = scalar_select %p25, %s26, %s27
      %p31 = pneg %p25
      %p32 = scmp.eq.s32.totalorder %s16, 1
      %p33 = por %p31, %p32
      %p34 = scmp.ne.s32.totalorder %s26, %s29
      %p35 = scmp.eq.s32.totalorder %s16, 0
      %p36 = por %p34, %p35
      %p37 = scmp.ne.s32.totalorder %s26, %s29
      %p38 = scmp.eq.s32.totalorder %s21, 1
      %p39 = por %p37, %p38
      %p40 = scmp.ne.s32.totalorder %s29, %s30
      %p41 = scmp.eq.s32.totalorder %s21, 0
      %p42 = por %p40, %p41
      %p43 = scmp.ne.s32.totalorder %s29, %s30
      %p44 = scmp.eq.s32.totalorder %s22, 1
      %p45 = por %p43, %p44
      %p47 = scmp.ne.s32.totalorder %s30, %s46
      %p48 = scmp.eq.s32.totalorder %s22, 0
      %p49 = por %p47, %p48
      %s51 = sadd.s32 %s50, 1
      %p54 = scmp.eq.s32.totalorder %s16, 1
      %p55 = scmp.ne.s32.totalorder %s50, %s52
      %p56 = scmp.eq.s32.totalorder %s16, 0
      %p57 = por %p55, %p56
      %p58 = scmp.ne.s32.totalorder %s50, %s52
      %p59 = scmp.eq.s32.totalorder %s21, 1
      %p60 = por %p58, %p59
      %p61 = scmp.ne.s32.totalorder %s52, %s53
      %p62 = scmp.eq.s32.totalorder %s21, 0
      %p63 = por %p61, %p62
      %p64 = scmp.ne.s32.totalorder %s52, %s53
      %p65 = scmp.eq.s32.totalorder %s22, 1
      %p66 = por %p64, %p65
      %p68 = scmp.ne.s32.totalorder %s53, %s67
      %p69 = scmp.eq.s32.totalorder %s22, 0
      %p70 = por %p68, %p69
      %s72 = sadd.s32 %s71, 1
      %p75 = scmp.eq.s32.totalorder %s16, 1
      %p76 = scmp.ne.s32.totalorder %s71, %s73
      %p77 = scmp.eq.s32.totalorder %s16, 0
      %p78 = por %p76, %p77
      %p79 = scmp.ne.s32.totalorder %s71, %s73
      %p80 = scmp.eq.s32.totalorder %s21, 1
      %p81 = por %p79, %p80
      %p82 = scmp.ne.s32.totalorder %s73, %s74
      %p83 = scmp.eq.s32.totalorder %s21, 0
      %p84 = por %p82, %p83
      %p85 = scmp.ne.s32.totalorder %s73, %s74
      %p86 = scmp.eq.s32.totalorder %s22, 1
      %p87 = por %p85, %p86
      %p89 = scmp.ne.s32.totalorder %s74, %s88
      %p90 = scmp.eq.s32.totalorder %s22, 0
      %p91 = por %p89, %p90
      %s92 = ssub.s32 %s16, %s23
      %p93 = scmp.eq.s32.totalorder %s92, 0
      %s95 = sadd.s32 %s94, 1
      %s96 = scalar_select %p93, %s94, %s95
      %p99 = pneg %p93
      %p100 = scmp.eq.s32.totalorder %s16, 1
      %p101 = por %p99, %p100
      %p102 = scmp.ne.s32.totalorder %s94, %s97
      %p103 = scmp.eq.s32.totalorder %s16, 0
      %p104 = por %p102, %p103
      %p105 = scmp.ne.s32.totalorder %s94, %s97
      %p106 = scmp.eq.s32.totalorder %s21, 1
      %p107 = por %p105, %p106
      %p108 = scmp.ne.s32.totalorder %s97, %s98
      %p109 = scmp.eq.s32.totalorder %s21, 0
      %p110 = por %p108, %p109
      %p111 = scmp.ne.s32.totalorder %s97, %s98
      %p112 = scmp.eq.s32.totalorder %s22, 1
      %p113 = por %p111, %p112
      %p115 = scmp.ne.s32.totalorder %s98, %s114
      %p116 = scmp.eq.s32.totalorder %s22, 0
      %p117 = por %p115, %p116
      %p118 = scmp.le.s32.totalorder 1, %s16
      %p119 = scmp.lt.s32.totalorder %s16, 3
      %p120 = pnand %p118, %p119
      %p121 = pneg %p120
      // Predicated region
      $region9: #{tpu_custom_call.1} parent=5 // pred_check
        _
      $region10: #{tpu_custom_call.1} parent=5 // pred_check_branch
        %123 = sbr.rel (%p120) target = $region12
      $region11: #{tpu_custom_call.1} parent=5 // pred_region
        %s124 = ssub.s32 %s16, 1
        // Predicated region
        $region13: #{tpu_custom_call.1} parent=11 // pred_check
          %p125 = pneg %p63
        $region14: #{tpu_custom_call.1} parent=11 // pred_check_branch
          %127 = sbr.rel (%p125) target = $region16
        $region15: #{tpu_custom_call.1} parent=11 // pred_region
          %s129 = ssub.s32 2048, 2048
          %130 = vsyncadd [#allocation6], %s129
          %s131 = sshll.u32 [#allocation5], 4
          %s132 = int_to_ptr.vmem [resolvable:$true] %s131
          %137 = dma.hbm_to_vmem [thread:$0]  %s1, 2048, %s132, [#allocation6], 128, 128, 8
        $region16: #{tpu_custom_call.1} parent=11 // pred_fallthru
          _
        // Predicated region
        $region17: #{tpu_custom_call.1} parent=11 // pred_check
          %p138 = pneg %p84
        $region18: #{tpu_custom_call.1} parent=11 // pred_check_branch
          %140 = sbr.rel (%p138) target = $region20
        $region19: #{tpu_custom_call.1} parent=11 // pred_region
          %s142 = ssub.s32 2048, 2048
          %143 = vsyncadd [#allocation6], %s142
          %s144 = sshll.u32 [#allocation7], 4
          %s145 = int_to_ptr.vmem [resolvable:$true] %s144
          %150 = dma.hbm_to_vmem [thread:$0]  %s2, 2048, %s145, [#allocation6], 128, 128, 8
        $region20: #{tpu_custom_call.1} parent=11 // pred_fallthru
          _
      $region12: #{tpu_custom_call.1} parent=5 // pred_fallthru
        _
      %p151 = scmp.lt.s32.totalorder %s16, 2
      // Predicated region
      $region21: #{tpu_custom_call.1} parent=5 // pred_check
        %p152 = pneg %p151
      $region22: #{tpu_custom_call.1} parent=5 // pred_check_branch
        %154 = sbr.rel (%p152) target = $region24
      $region23: #{tpu_custom_call.1} parent=5 // pred_region
        // Predicated region
        $region25: #{tpu_custom_call.1} parent=23 // pred_check
          %p155 = pneg %p36
        $region26: #{tpu_custom_call.1} parent=23 // pred_check_branch
          %157 = sbr.rel (%p155) target = $region28
        $region27: #{tpu_custom_call.1} parent=23 // pred_region
          %s158 = sand.u32 %s26, 1
          %s159 = scalar_lea.sflag [#allocation3], %s158
          %s160 = sand.u32 %s26, 1
          %s161 = smul.addr %s160, 8
          %s162 = scalar_lea.vmem [#allocation2], %s161
          %s164 = ssub.s32 128, 128
          %165 = vsyncadd %s159, %s164
          %s166 = smul.addr %s16, 128
          %s167 = scalar_lea.hbm %s0, %s166
          %s169 = sshll.u32 %s162, 4
          %s170 = int_to_ptr.vmem [resolvable:$true] %s169
          %172 = dma.hbm_to_vmem [thread:$0]  %s167, 128, %s170, %s159
        $region28: #{tpu_custom_call.1} parent=23 // pred_fallthru
          _
      $region24: #{tpu_custom_call.1} parent=5 // pred_fallthru
        _
      %p173 = scmp.le.s32.totalorder 1, %s16
      %p174 = scmp.lt.s32.totalorder %s16, 3
      %p175 = pnand %p173, %p174
      %p176 = pneg %p175
      // Predicated region
      $region29: #{tpu_custom_call.1} parent=5 // pred_check
        _
      $region30: #{tpu_custom_call.1} parent=5 // pred_check_branch
        %178 = sbr.rel (%p175) target = $region32
      $region31: #{tpu_custom_call.1} parent=5 // pred_region
        %s179 = ssub.s32 %s16, 1
        %s180 = sand.u32 %s29, 1
        %s181 = scalar_lea.sflag [#allocation3], %s180
        %s182 = sand.u32 %s29, 1
        %s183 = smul.addr %s182, 8
        %s184 = scalar_lea.vmem [#allocation2], %s183
        // Predicated region
        $region33: #{tpu_custom_call.1} parent=31 // pred_check
          %p185 = pneg %p42
        $region34: #{tpu_custom_call.1} parent=31 // pred_check_branch
          %187 = sbr.rel (%p185) target = $region36
        $region35: #{tpu_custom_call.1} parent=31 // pred_region
          %188 = dma.done %s181, 128
        $region36: #{tpu_custom_call.1} parent=31 // pred_fallthru
          _
        // Predicated region
        $region37: #{tpu_custom_call.1} parent=31 // pred_check
          %p189 = pneg %p63
        $region38: #{tpu_custom_call.1} parent=31 // pred_check_branch
          %191 = sbr.rel (%p189) target = $region40
        $region39: #{tpu_custom_call.1} parent=31 // pred_region
          %192 = dma.done [#allocation6], 2048
        $region40: #{tpu_custom_call.1} parent=31 // pred_fallthru
          _
        // Predicated region
        $region41: #{tpu_custom_call.1} parent=31 // pred_check
          %p193 = pneg %p84
        $region42: #{tpu_custom_call.1} parent=31 // pred_check_branch
          %195 = sbr.rel (%p193) target = $region44
        $region43: #{tpu_custom_call.1} parent=31 // pred_region
          %196 = dma.done [#allocation6], 2048
        $region44: #{tpu_custom_call.1} parent=31 // pred_fallthru
          _
        %s197 = sand.u32 %s29, 1
        %s198 = scalar_lea.sflag [#allocation3], %s197
        %s199 = sand.u32 %s29, 1
        %s200 = smul.addr %s199, 8
        %s201 = scalar_lea.vmem [#allocation2], %s200
        %p202 = pneg %p42
        %p203 = pneg %p39
        %p204 = pneg %p63
        %p205 = pneg %p60
        %p206 = pneg %p84
        %p207 = pneg %p81
        %p208 = pneg %p110
        %p209 = pneg %p107
        %s210 = sand.u32 %s97, 1
        %s211 = scalar_lea.sflag [#allocation4], %s210
        %s212 = sand.u32 %s97, 1
        %s213 = smul.addr %s212, 8
        %s214 = scalar_lea.vmem [#allocation8], %s213
        %v215 = vld [vmem:[%s184] sm:$0xff]
        %v216 = vld [vmem:[#allocation5] sm:$0xff]
        %v217 = vld [vmem:[#allocation5 + $0x8] sm:$0xff]
        %v218 = vld [vmem:[#allocation5 + $0x10] sm:$0xff]
        %v219 = vld [vmem:[#allocation5 + $0x18] sm:$0xff]
        %v220 = vld [vmem:[#allocation5 + $0x20] sm:$0xff]
        %v221 = vld [vmem:[#allocation5 + $0x28] sm:$0xff]
        %v222 = vld [vmem:[#allocation5 + $0x30] sm:$0xff]
        %v223 = vld [vmem:[#allocation5 + $0x38] sm:$0xff]
        %v224 = vld [vmem:[#allocation5 + $0x40] sm:$0xff]
        %v225 = vld [vmem:[#allocation5 + $0x48] sm:$0xff]
        %v226 = vld [vmem:[#allocation5 + $0x50] sm:$0xff]
        %v227 = vld [vmem:[#allocation5 + $0x58] sm:$0xff]
        %v228 = vld [vmem:[#allocation5 + $0x60] sm:$0xff]
        %v229 = vld [vmem:[#allocation5 + $0x68] sm:$0xff]
        %v230 = vld [vmem:[#allocation5 + $0x70] sm:$0xff]
        %v231 = vld [vmem:[#allocation5 + $0x78] sm:$0xff]
        %232 = vmatprep.subr.mxu0 0.0
        %233 = vmatpush1.msra.mxu0 %v231
        %234 = vmatprep.subr.mxu0 0.0
        %235 = vmatpush1.msra.mxu0 %v230
        %236 = vmatprep.subr.mxu0 0.0
        %237 = vmatpush1.msra.mxu0 %v229
        %238 = vmatprep.subr.mxu0 0.0
        %239 = vmatpush1.msra.mxu0 %v228
        %240 = vmatprep.subr.mxu0 0.0
        %241 = vmatpush1.msra.mxu0 %v227
        %242 = vmatprep.subr.mxu0 0.0
        %243 = vmatpush1.msra.mxu0 %v226
        %244 = vmatprep.subr.mxu0 0.0
        %245 = vmatpush1.msra.mxu0 %v225
        %246 = vmatprep.subr.mxu0 0.0
        %247 = vmatpush1.msra.mxu0 %v224
        %248 = vmatprep.subr.mxu0 0.0
        %249 = vmatpush1.msra.mxu0 %v223
        %250 = vmatprep.subr.mxu0 0.0
        %251 = vmatpush1.msra.mxu0 %v222
        %252 = vmatprep.subr.mxu0 0.0
        %253 = vmatpush1.msra.mxu0 %v221
        %254 = vmatprep.subr.mxu0 0.0
        %255 = vmatpush1.msra.mxu0 %v220
        %256 = vmatprep.subr.mxu0 0.0
        %257 = vmatpush1.msra.mxu0 %v219
        %258 = vmatprep.subr.mxu0 0.0
        %259 = vmatpush1.msra.mxu0 %v218
        %260 = vmatprep.subr.mxu0 0.0
        %261 = vmatpush1.msra.mxu0 %v217
        %262 = vmatprep.subr.mxu0 0.0
        %263 = vmatpush1.msra.mxu0 %v216
        %264 = vmatprep.subr.mxu0 0.0
        %265 = vmatpush2.msra.mxu0 0.0
        %266 = vmatprep.subr.mxu0 0.0
        %267 = vmatpush2.msra.mxu0 0.0
        %268 = vmatprep.subr.mxu0 0.0
        %269 = vmatpush2.msra.mxu0 0.0
        %270 = vmatprep.subr.mxu0 0.0
        %271 = vmatpush2.msra.mxu0 0.0
        %272 = vmatprep.subr.mxu0 0.0
        %273 = vmatpush2.msra.mxu0 0.0
        %274 = vmatprep.subr.mxu0 0.0
        %275 = vmatpush2.msra.mxu0 0.0
        %276 = vmatprep.subr.mxu0 0.0
        %277 = vmatpush2.msra.mxu0 0.0
        %278 = vmatprep.subr.mxu0 0.0
        %279 = vmatpush2.msra.mxu0 0.0
        %280 = vmatprep.subr.mxu0 0.0
        %281 = vmatpush2.msra.mxu0 0.0
        %282 = vmatprep.subr.mxu0 0.0
        %283 = vmatpush2.msra.mxu0 0.0
        %284 = vmatprep.subr.mxu0 0.0
        %285 = vmatpush2.msra.mxu0 0.0
        %286 = vmatprep.subr.mxu0 0.0
        %287 = vmatpush2.msra.mxu0 0.0
        %288 = vmatprep.subr.mxu0 0.0
        %289 = vmatpush2.msra.mxu0 0.0
        %290 = vmatprep.subr.mxu0 0.0
        %291 = vmatpush2.msra.mxu0 0.0
        %292 = vmatprep.subr.mxu0 0.0
        %293 = vmatpush2.msra.mxu0 0.0
        %294 = vmatprep.subr.mxu0 0.0
        %295 = vmatpush2.msra.mxu0 0.0
        %296 = vmatprep.mubr.f32.mxu0 0.0
        %297 = vmatmul.mubr.f32.gmra.mxu0 %v215
        %v298 = vpop.f32.mrf.mxu0
        %v299 = vadd.f32 0.0, %v298
        %v300 = vpop.f32.mrf.mxu0
        %301 = vdwg.mxu0
        %v302 = vmax.f32 %v299, 0.0
        %v303 = vmul.f32 %v302, %v302
        %v304 = vld [vmem:[#allocation7] sm:$0xff]
        %v305 = vld [vmem:[#allocation7 + $0x8] sm:$0xff]
        %v306 = vld [vmem:[#allocation7 + $0x10] sm:$0xff]
        %v307 = vld [vmem:[#allocation7 + $0x18] sm:$0xff]
        %v308 = vld [vmem:[#allocation7 + $0x20] sm:$0xff]
        %v309 = vld [vmem:[#allocation7 + $0x28] sm:$0xff]
        %v310 = vld [vmem:[#allocation7 + $0x30] sm:$0xff]
        %v311 = vld [vmem:[#allocation7 + $0x38] sm:$0xff]
        %v312 = vld [vmem:[#allocation7 + $0x40] sm:$0xff]
        %v313 = vld [vmem:[#allocation7 + $0x48] sm:$0xff]
        %v314 = vld [vmem:[#allocation7 + $0x50] sm:$0xff]
        %v315 = vld [vmem:[#allocation7 + $0x58] sm:$0xff]
        %v316 = vld [vmem:[#allocation7 + $0x60] sm:$0xff]
        %v317 = vld [vmem:[#allocation7 + $0x68] sm:$0xff]
        %v318 = vld [vmem:[#allocation7 + $0x70] sm:$0xff]
        %v319 = vld [vmem:[#allocation7 + $0x78] sm:$0xff]
        %320 = vmatprep.subr.mxu0 0.0
        %321 = vmatpush1.msra.mxu0 %v319
        %322 = vmatprep.subr.mxu0 0.0
        %323 = vmatpush1.msra.mxu0 %v318
        %324 = vmatprep.subr.mxu0 0.0
        %325 = vmatpush1.msra.mxu0 %v317
        %326 = vmatprep.subr.mxu0 0.0
        %327 = vmatpush1.msra.mxu0 %v316
        %328 = vmatprep.subr.mxu0 0.0
        %329 = vmatpush1.msra.mxu0 %v315
        %330 = vmatprep.subr.mxu0 0.0
        %331 = vmatpush1.msra.mxu0 %v314
        %332 = vmatprep.subr.mxu0 0.0
        %333 = vmatpush1.msra.mxu0 %v313
        %334 = vmatprep.subr.mxu0 0.0
        %335 = vmatpush1.msra.mxu0 %v312
        %336 = vmatprep.subr.mxu0 0.0
        %337 = vmatpush1.msra.mxu0 %v311
        %338 = vmatprep.subr.mxu0 0.0
        %339 = vmatpush1.msra.mxu0 %v310
        %340 = vmatprep.subr.mxu0 0.0
        %341 = vmatpush1.msra.mxu0 %v309
        %342 = vmatprep.subr.mxu0 0.0
        %343 = vmatpush1.msra.mxu0 %v308
        %344 = vmatprep.subr.mxu0 0.0
        %345 = vmatpush1.msra.mxu0 %v307
        %346 = vmatprep.subr.mxu0 0.0
        %347 = vmatpush1.msra.mxu0 %v306
        %348 = vmatprep.subr.mxu0 0.0
        %349 = vmatpush1.msra.mxu0 %v305
        %350 = vmatprep.subr.mxu0 0.0
        %351 = vmatpush1.msra.mxu0 %v304
        %352 = vmatprep.subr.mxu0 0.0
        %353 = vmatpush2.msra.mxu0 0.0
        %354 = vmatprep.subr.mxu0 0.0
        %355 = vmatpush2.msra.mxu0 0.0
        %356 = vmatprep.subr.mxu0 0.0
        %357 = vmatpush2.msra.mxu0 0.0
        %358 = vmatprep.subr.mxu0 0.0
        %359 = vmatpush2.msra.mxu0 0.0
        %360 = vmatprep.subr.mxu0 0.0
        %361 = vmatpush2.msra.mxu0 0.0
        %362 = vmatprep.subr.mxu0 0.0
        %363 = vmatpush2.msra.mxu0 0.0
        %364 = vmatprep.subr.mxu0 0.0
        %365 = vmatpush2.msra.mxu0 0.0
        %366 = vmatprep.subr.mxu0 0.0
        %367 = vmatpush2.msra.mxu0 0.0
        %368 = vmatprep.subr.mxu0 0.0
        %369 = vmatpush2.msra.mxu0 0.0
        %370 = vmatprep.subr.mxu0 0.0
        %371 = vmatpush2.msra.mxu0 0.0
        %372 = vmatprep.subr.mxu0 0.0
        %373 = vmatpush2.msra.mxu0 0.0
        %374 = vmatprep.subr.mxu0 0.0
        %375 = vmatpush2.msra.mxu0 0.0
        %376 = vmatprep.subr.mxu0 0.0
        %377 = vmatpush2.msra.mxu0 0.0
        %378 = vmatprep.subr.mxu0 0.0
        %379 = vmatpush2.msra.mxu0 0.0
        %380 = vmatprep.subr.mxu0 0.0
        %381 = vmatpush2.msra.mxu0 0.0
        %382 = vmatprep.subr.mxu0 0.0
        %383 = vmatpush2.msra.mxu0 0.0
        %384 = vmatprep.mubr.f32.mxu0 0.0
        %385 = vmatmul.mubr.f32.gmra.mxu0 %v303
        %v386 = vpop.f32.mrf.mxu0
        %v387 = vadd.f32 0.0, %v386
        %v388 = vpop.f32.mrf.mxu0
        %389 = vdwg.mxu0
        %390 = vst [vmem:[%s214] sm:$0xff] %v387
        %s391 = sand.u32 %s97, 1
        %s392 = scalar_lea.sflag [#allocation4], %s391
        %s393 = sand.u32 %s97, 1
        %s394 = smul.addr %s393, 8
        %s395 = scalar_lea.vmem [#allocation8], %s394
        // Predicated region
        $region45: #{tpu_custom_call.1} parent=31 // pred_check
          %p396 = pneg %p107
        $region46: #{tpu_custom_call.1} parent=31 // pred_check_branch
          %398 = sbr.rel (%p396) target = $region48
        $region47: #{tpu_custom_call.1} parent=31 // pred_region
          %s400 = ssub.s32 128, 128
          %401 = vsyncadd %s392, %s400
          %s402 = smul.addr %s21, 128
          %s403 = scalar_lea.hbm %s3, %s402
          %s405 = sshll.u32 %s395, 4
          %s406 = int_to_ptr.vmem [resolvable:$true] %s405
          %408 = dma.vmem_to_hbm [thread:$0]  %s406, 128, %s403, %s392
        $region48: #{tpu_custom_call.1} parent=31 // pred_fallthru
          _
      $region32: #{tpu_custom_call.1} parent=5 // pred_fallthru
        _
      %p409 = scmp.le.s32.totalorder 2, %s16
      // Predicated region
      $region49: #{tpu_custom_call.1} parent=5 // pred_check
        %p410 = pneg %p409
      $region50: #{tpu_custom_call.1} parent=5 // pred_check_branch
        %412 = sbr.rel (%p410) target = $region52
      $region51: #{tpu_custom_call.1} parent=5 // pred_region
        %s413 = ssub.s32 %s16, 2
        // Predicated region
        $region53: #{tpu_custom_call.1} parent=51 // pred_check
          %p414 = pneg %p113
        $region54: #{tpu_custom_call.1} parent=51 // pred_check_branch
          %416 = sbr.rel (%p414) target = $region56
        $region55: #{tpu_custom_call.1} parent=51 // pred_region
          %s417 = sand.u32 %s98, 1
          %s418 = scalar_lea.sflag [#allocation4], %s417
          %s419 = sand.u32 %s98, 1
          %s420 = smul.addr %s419, 8
          %s421 = scalar_lea.vmem [#allocation8], %s420
          %422 = dma.done %s418, 128
        $region56: #{tpu_custom_call.1} parent=51 // pred_fallthru
          _
      $region52: #{tpu_custom_call.1} parent=5 // pred_fallthru
        _
    $region6: #{tpu_custom_call.1} parent=1 // loop_footer
      %s20 = sadd.s32 1, %s16
    $region7: #{tpu_custom_call.1} parent=1 // loop_footer_branch
      %15 = sbr.rel target = $region3
    $region8: #{tpu_custom_call.1} parent=1 // loop_exit
      _
    %423 = vsyncpa [#allocation3], 1
    %s424 = scalar_lea.sflag [#allocation3], 1
    %425 = vsyncpa %s424, 1
    %426 = vsyncpa [#allocation6], 1
    %427 = vsyncpa [#allocation4], 1
    %s428 = scalar_lea.sflag [#allocation4], 1
    %429 = vsyncpa %s428, 1

</llo_original>
